<compile_context>
chip_gen: v5e
topology: v5e:2x2
jax: 0.10.0
libtpu: 0.0.40
codegen_flags: <defaults>
</compile_context>

<pallas_src>
import jax
import jax.numpy as jnp
from jax.experimental import pallas as pl
from jax.experimental.pallas import tpu as pltpu


def _attn_gate_kernel(g_ref, x_ref, wg_ref, wx_ref, b_ref, wpsi_ref, bpsi_ref,
                      out_ref):
    # g_ref:   (F_g, TS) f32      x_ref: (F_l, TS) f32
    # wg_ref:  (F_int, F_g) bf16  wx_ref: (F_int, F_l) bf16
    # b_ref:   (F_int, 1) f32     wpsi_ref: (F_int, 1) f32
    # bpsi_ref: (1,) f32 in SMEM  out_ref: (F_l, TS)
    x = x_ref[...]                                   # keep f32 for the epilogue
    g16 = g_ref[...].astype(jnp.bfloat16)            # MXU operands in bf16
    x16 = x.astype(jnp.bfloat16)
    a = (jnp.dot(wg_ref[...], g16, preferred_element_type=jnp.float32)
         + jnp.dot(wx_ref[...], x16, preferred_element_type=jnp.float32)
         + b_ref[...])                               # (F_int, TS) f32
    a = jnp.maximum(a, 0.0)                          # ReLU
    # psi reduction: VPU mul + cross-sublane sum (XLU) -- free slots here.
    psi_logit = jnp.sum(a * wpsi_ref[...], axis=0, keepdims=True) + bpsi_ref[0]
    psi = jax.nn.sigmoid(psi_logit)                  # (1, TS)
    out_ref[...] = (x * psi).astype(out_ref.dtype)   # broadcast over sublanes


def _fold_bn(w, gamma, beta, mean, var, eps=1e-5):
    """Fold eval-mode BatchNorm into a 1x1-conv matmul weight/bias.

    w: (C_in, C_out). Returns (w_fold, b_fold) with b_fold shape (C_out,).
    """
    scale = gamma / jnp.sqrt(var + eps)              # (C_out,)
    return w * scale[None, :], beta - mean * scale


def _pick_spatial_tile(hw, f_g, f_l, f_int,
                       vmem_budget_bytes=24 << 20, max_tile=4096):
    """Largest lane (spatial) tile that keeps double-buffered tiles in budget.

    Budget covers 2x(g + x + out) f32 tiles plus the f32 intermediate `a`.
    24 MiB fits comfortably on v5e/v6e (128 MiB VMEM) and v7x (64 MiB VMEM).
    max_tile keeps the grid from collapsing to 1-2 steps (v7x has 2 TCs).
    """
    bytes_per_col = 4 * (2 * (f_g + 2 * f_l) + 2 * f_int)
    cap = max(128, vmem_budget_bytes // max(bytes_per_col, 1))
    cap = min(cap, max_tile)
    if hw <= cap:
        return hw                       # full spatial extent (block == dim ok)
    return (cap // 128) * 128           # lane-aligned multiple of 128


@jax.jit
def unet_attention_block(g, x, params):
    """g: (N, F_g, H, W), x: (N, F_l, H, W)  ->  (N, F_l, H, W)."""
    N, F_g, H, W = g.shape
    _, F_l, _, _ = x.shape
    HW = H * W

    # ---- fold conv + BN params (glue, plain JAX; tiny arrays) ----
    wg, bg = _fold_bn(params["wg"], params["bn_g_gamma"], params["bn_g_beta"],
                      params["bn_g_mean"], params["bn_g_var"])
    wx, bx = _fold_bn(params["wx"], params["bn_x_gamma"], params["bn_x_beta"],
                      params["bn_x_mean"], params["bn_x_var"])
    wpsi, bpsi = _fold_bn(params["wpsi"], params["bn_p_gamma"],
                          params["bn_p_beta"], params["bn_p_mean"],
                          params["bn_p_var"])
    F_int = wg.shape[1]

    # (C_out, C_in) orientation for the channels-on-sublanes layout; bf16 MXU.
    wg_t = wg.T.astype(jnp.bfloat16)                 # (F_int, F_g)
    wx_t = wx.T.astype(jnp.bfloat16)                 # (F_int, F_l)
    b_col = (bg + bx).reshape(F_int, 1)              # combined branch bias, f32
    wpsi_col = wpsi.reshape(F_int, 1)                # f32 (VPU path)
    bpsi_s = bpsi.reshape(1,)                        # scalar -> SMEM

    # ---- free reshapes: NCHW -> (N, C, H*W); no transpose, no pad ----
    g3 = g.reshape(N, F_g, HW)
    x3 = x.reshape(N, F_l, HW)

    ts = _pick_spatial_tile(HW, F_g, F_l, F_int)
    n_s = pl.cdiv(HW, ts)                            # partial last block is
    grid = (N, n_s)                                  # masked by Pallas

    # Advisory cost hint for the surrounding XLA schedule.
    m_total = N * HW
    cost = pl.CostEstimate(
        flops=2 * m_total * F_int * (F_g + F_l) + 4 * m_total * F_int
              + 2 * m_total * F_l,
        transcendentals=m_total,
        bytes_accessed=4 * m_total * (F_g + 2 * F_l)
                       + 2 * F_int * (F_g + F_l) + 8 * F_int + 4,
    )

    out3 = pl.pallas_call(
        _attn_gate_kernel,
        out_shape=jax.ShapeDtypeStruct((N, F_l, HW), x.dtype),
        grid=grid,
        in_specs=[
            pl.BlockSpec((None, F_g, ts), lambda n, s: (n, 0, s)),
            pl.BlockSpec((None, F_l, ts), lambda n, s: (n, 0, s)),
            pl.BlockSpec((F_int, F_g), lambda n, s: (0, 0)),
            pl.BlockSpec((F_int, F_l), lambda n, s: (0, 0)),
            pl.BlockSpec((F_int, 1), lambda n, s: (0, 0)),
            pl.BlockSpec((F_int, 1), lambda n, s: (0, 0)),
            pl.BlockSpec(memory_space=pltpu.MemorySpace.SMEM),
        ],
        out_specs=pl.BlockSpec((None, F_l, ts), lambda n, s: (n, 0, s)),
        compiler_params=pltpu.CompilerParams(
            dimension_semantics=("parallel", "parallel"),
            vmem_limit_bytes=48 * 1024 * 1024),
        cost_estimate=cost,
    )(g3, x3, wg_t, wx_t, b_col, wpsi_col, bpsi_s)

    return out3.reshape(N, F_l, H, W)


def _reference(g, x, params):
    """Pure-JAX f32 reference of the same (eval-mode-BN) forward pass, NCHW."""
    wg, bg = _fold_bn(params["wg"], params["bn_g_gamma"], params["bn_g_beta"],
                      params["bn_g_mean"], params["bn_g_var"])
    wx, bx = _fold_bn(params["wx"], params["bn_x_gamma"], params["bn_x_beta"],
                      params["bn_x_mean"], params["bn_x_var"])
    wpsi, bpsi = _fold_bn(params["wpsi"], params["bn_p_gamma"],
                          params["bn_p_beta"], params["bn_p_mean"],
                          params["bn_p_var"])
    a = (jnp.einsum("nchw,cf->nfhw", g, wg) + bg[None, :, None, None]
         + jnp.einsum("nchw,cf->nfhw", x, wx) + bx[None, :, None, None])
    a = jnp.maximum(a, 0.0)
    psi = jax.nn.sigmoid(jnp.einsum("nfhw,f->nhw", a, wpsi[:, 0]) + bpsi[0])
    return x * psi[:, None, :, :]


def _make_params(key, F_g, F_l, F_int):
    ks = jax.random.split(key, 12)
    return {
        # 1x1 conv weights stored as (C_in, C_out) matmul matrices
        "wg": jax.random.normal(ks[0], (F_g, F_int), jnp.float32) * 0.2,
        "wx": jax.random.normal(ks[1], (F_l, F_int), jnp.float32) * 0.2,
        "wpsi": jax.random.normal(ks[2], (F_int, 1), jnp.float32) * 0.2,
        # BatchNorm2d(F_int) for W_g branch
        "bn_g_gamma": jax.random.uniform(ks[3], (F_int,), jnp.float32, 0.5, 1.5),
        "bn_g_beta": jax.random.normal(ks[4], (F_int,), jnp.float32) * 0.1,
        "bn_g_mean": jax.random.normal(ks[5], (F_int,), jnp.float32) * 0.1,
        "bn_g_var": jax.random.uniform(ks[6], (F_int,), jnp.float32, 0.5, 1.5),
        # BatchNorm2d(F_int) for W_x branch
        "bn_x_gamma": jax.random.uniform(ks[7], (F_int,), jnp.float32, 0.5, 1.5),
        "bn_x_beta": jax.random.normal(ks[8], (F_int,), jnp.float32) * 0.1,
        "bn_x_mean": jax.random.normal(ks[9], (F_int,), jnp.float32) * 0.1,
        "bn_x_var": jax.random.uniform(ks[10], (F_int,), jnp.float32, 0.5, 1.5),
        # BatchNorm2d(1) for Psi branch
        "bn_p_gamma": jnp.array([1.1], jnp.float32),
        "bn_p_beta": jnp.array([0.05], jnp.float32),
        "bn_p_mean": jnp.array([0.02], jnp.float32),
        "bn_p_var": jnp.array([0.9], jnp.float32),
    }


if __name__ == "__main__":
    N, F_g, F_l, F_int, H, W = 2, 4, 4, 8, 16, 16
    key = jax.random.PRNGKey(0)
    kg, kx, kp = jax.random.split(key, 3)
    g = jax.random.normal(kg, (N, F_g, H, W), jnp.float32)
    x = jax.random.normal(kx, (N, F_l, H, W), jnp.float32)
    params = _make_params(kp, F_g, F_l, F_int)

    out = unet_attention_block(g, x, params)
    out = jax.block_until_ready(out)

    ref = _reference(g, x, params)
    assert out.shape == (N, F_l, H, W)
    # Tolerance re-baselined for bf16 MXU operands (f32 accumulation/epilogue).
    assert jnp.allclose(out, ref, atol=3e-2, rtol=3e-2)
    print("KERNEL_OK")
</pallas_src>

<mosaic_0001>
module attributes {stable_mosaic.version = 11 : i64} {
  func.func @_attn_gate_kernel(%arg0: i32, %arg1: i32, %arg2: memref<1x4x256xf32, #tpu.memory_space<vmem>>, %arg3: memref<1x4x256xf32, #tpu.memory_space<vmem>>, %arg4: memref<8x4xbf16, #tpu.memory_space<vmem>>, %arg5: memref<8x4xbf16, #tpu.memory_space<vmem>>, %arg6: memref<8x1xf32, #tpu.memory_space<vmem>>, %arg7: memref<8x1xf32, #tpu.memory_space<vmem>>, %arg8: memref<1xf32, #tpu.memory_space<smem>>, %arg9: memref<1x4x256xf32, #tpu.memory_space<vmem>>) attributes {dimension_semantics = [#tpu.dimension_semantics<parallel>, #tpu.dimension_semantics<parallel>], iteration_bounds = array<i64: 2, 1>, scalar_prefetch = 0 : i64, scratch_operands = 0 : i64, tpu.core_type = #tpu.core_type<tc>, window_params = [{transform_indices = @transform_0, window_bounds = array<i64: 1, 4, 256>}, {transform_indices = @transform_1, window_bounds = array<i64: 1, 4, 256>}, {pipeline_mode = #tpu.pipeline_mode<synchronous>, transform_indices = @transform_2, window_bounds = array<i64: 8, 4>}, {pipeline_mode = #tpu.pipeline_mode<synchronous>, transform_indices = @transform_3, window_bounds = array<i64: 8, 4>}, {pipeline_mode = #tpu.pipeline_mode<synchronous>, transform_indices = @transform_4, window_bounds = array<i64: 8, 1>}, {pipeline_mode = #tpu.pipeline_mode<synchronous>, transform_indices = @transform_5, window_bounds = array<i64: 8, 1>}, {transform_indices = @transform_6, window_bounds = array<i64: 1>}, {transform_indices = @transform_7, window_bounds = array<i64: 1, 4, 256>}]} {
    %c0 = arith.constant 0 : index
    %c0_0 = arith.constant 0 : index
    %c0_1 = arith.constant 0 : index
    %0 = vector.load %arg3[%c0, %c0_0, %c0_1] : memref<1x4x256xf32, #tpu.memory_space<vmem>>, vector<1x4x256xf32>
    %1 = vector.shape_cast %0 : vector<1x4x256xf32> to vector<4x256xf32>
    %c0_2 = arith.constant 0 : index
    %c0_3 = arith.constant 0 : index
    %c0_4 = arith.constant 0 : index
    %2 = vector.load %arg2[%c0_2, %c0_3, %c0_4] : memref<1x4x256xf32, #tpu.memory_space<vmem>>, vector<1x4x256xf32>
    %3 = vector.shape_cast %2 : vector<1x4x256xf32> to vector<4x256xf32>
    %4 = arith.truncf %3 : vector<4x256xf32> to vector<4x256xbf16>
    %5 = arith.truncf %1 : vector<4x256xf32> to vector<4x256xbf16>
    %c0_5 = arith.constant 0 : index
    %c0_6 = arith.constant 0 : index
    %6 = vector.load %arg4[%c0_5, %c0_6] : memref<8x4xbf16, #tpu.memory_space<vmem>>, vector<8x4xbf16>
    %cst = arith.constant dense<0.000000e+00> : vector<8x256xf32>
    %7 = tpu.matmul %6, %4, %cst {dimension_numbers = #tpu.dot_dimension_numbers<[1], [0], [0], [1], [0, 0, 1, 1], [], []>} : vector<8x4xbf16>, vector<4x256xbf16>, vector<8x256xf32> -> vector<8x256xf32>
    %c0_7 = arith.constant 0 : index
    %c0_8 = arith.constant 0 : index
    %8 = vector.load %arg5[%c0_7, %c0_8] : memref<8x4xbf16, #tpu.memory_space<vmem>>, vector<8x4xbf16>
    %cst_9 = arith.constant dense<0.000000e+00> : vector<8x256xf32>
    %9 = tpu.matmul %8, %5, %cst_9 {dimension_numbers = #tpu.dot_dimension_numbers<[1], [0], [0], [1], [0, 0, 1, 1], [], []>} : vector<8x4xbf16>, vector<4x256xbf16>, vector<8x256xf32> -> vector<8x256xf32>
    %10 = arith.addf %7, %9 : vector<8x256xf32>
    %c0_10 = arith.constant 0 : index
    %c0_11 = arith.constant 0 : index
    %11 = vector.load %arg6[%c0_10, %c0_11] : memref<8x1xf32, #tpu.memory_space<vmem>>, vector<8x1xf32>
    %12 = vector.broadcast %11 : vector<8x1xf32> to vector<8x256xf32>
    %13 = arith.addf %10, %12 : vector<8x256xf32>
    %cst_12 = arith.constant 0.000000e+00 : f32
    %14 = vector.broadcast %cst_12 : f32 to vector<8x256xf32>
    %15 = arith.maximumf %13, %14 : vector<8x256xf32>
    %c0_13 = arith.constant 0 : index
    %c0_14 = arith.constant 0 : index
    %16 = vector.load %arg7[%c0_13, %c0_14] : memref<8x1xf32, #tpu.memory_space<vmem>>, vector<8x1xf32>
    %17 = vector.broadcast %16 : vector<8x1xf32> to vector<8x256xf32>
    %18 = arith.mulf %15, %17 : vector<8x256xf32>
    %cst_15 = arith.constant dense<0.000000e+00> : vector<256xf32>
    %19 = vector.multi_reduction <add>, %18, %cst_15 [0] : vector<8x256xf32> to vector<256xf32>
    %20 = vector.shape_cast %19 : vector<256xf32> to vector<1x256xf32>
    %c0_16 = arith.constant 0 : index
    %21 = memref.load %arg8[%c0_16] : memref<1xf32, #tpu.memory_space<smem>>
    %22 = vector.broadcast %21 : f32 to vector<1x256xf32>
    %23 = arith.addf %20, %22 : vector<1x256xf32>
    %24 = arith.negf %23 : vector<1x256xf32>
    %25 = math.exp %24 : vector<1x256xf32>
    %cst_17 = arith.constant 1.000000e+00 : f32
    %26 = vector.broadcast %cst_17 : f32 to vector<1x256xf32>
    %27 = arith.addf %26, %25 : vector<1x256xf32>
    %28 = arith.divf %26, %27 : vector<1x256xf32>
    %29 = vector.broadcast %28 : vector<1x256xf32> to vector<4x256xf32>
    %30 = arith.mulf %1, %29 : vector<4x256xf32>
    %c0_18 = arith.constant 0 : index
    %c0_19 = arith.constant 0 : index
    %c0_20 = arith.constant 0 : index
    %31 = vector.load %arg9[%c0_18, %c0_19, %c0_20] : memref<1x4x256xf32, #tpu.memory_space<vmem>>, vector<1x4x256xf32>
    %32 = vector.shape_cast %31 : vector<1x4x256xf32> to vector<4x256xf32>
    %33 = vector.shape_cast %30 : vector<4x256xf32> to vector<1x4x256xf32>
    tpu.vector_store %arg9[%c0_18, %c0_19, %c0_20], %33 {strides = array<i32>} : memref<1x4x256xf32, #tpu.memory_space<vmem>>, vector<1x4x256xf32>,
    return
  }
  func.func @transform_0(%arg0: i32, %arg1: i32) -> (i32, i32, i32) {
    %c0_i32 = arith.constant 0 : i32
    %c0_i32_0 = arith.constant 0 : i32
    return %arg0, %c0_i32, %arg1 : i32, i32, i32
  }
  func.func @transform_1(%arg0: i32, %arg1: i32) -> (i32, i32, i32) {
    %c0_i32 = arith.constant 0 : i32
    %c0_i32_0 = arith.constant 0 : i32
    return %arg0, %c0_i32, %arg1 : i32, i32, i32
  }
  func.func @transform_2(%arg0: i32, %arg1: i32) -> (i32, i32) {
    %c0_i32 = arith.constant 0 : i32
    %c0_i32_0 = arith.constant 0 : i32
    %c0_i32_1 = arith.constant 0 : i32
    return %c0_i32, %c0_i32_0 : i32, i32
  }
  func.func @transform_3(%arg0: i32, %arg1: i32) -> (i32, i32) {
    %c0_i32 = arith.constant 0 : i32
    %c0_i32_0 = arith.constant 0 : i32
    %c0_i32_1 = arith.constant 0 : i32
    return %c0_i32, %c0_i32_0 : i32, i32
  }
  func.func @transform_4(%arg0: i32, %arg1: i32) -> (i32, i32) {
    %c0_i32 = arith.constant 0 : i32
    %c0_i32_0 = arith.constant 0 : i32
    %c0_i32_1 = arith.constant 0 : i32
    return %c0_i32, %c0_i32_0 : i32, i32
  }
  func.func @transform_5(%arg0: i32, %arg1: i32) -> (i32, i32) {
    %c0_i32 = arith.constant 0 : i32
    %c0_i32_0 = arith.constant 0 : i32
    %c0_i32_1 = arith.constant 0 : i32
    return %c0_i32, %c0_i32_0 : i32, i32
  }
  func.func @transform_6(%arg0: i32, %arg1: i32) -> i32 {
    %c0_i32 = arith.constant 0 : i32
    %c0_i32_0 = arith.constant 0 : i32
    return %c0_i32 : i32
  }
  func.func @transform_7(%arg0: i32, %arg1: i32) -> (i32, i32, i32) {
    %c0_i32 = arith.constant 0 : i32
    %c0_i32_0 = arith.constant 0 : i32
    return %arg0, %c0_i32, %arg1 : i32, i32, i32
  }
}

</mosaic_0001>

<llo_original>
// kernel: unet_attention_block.1
$region0: #{unet_attention_block.1}
  #allocation0 [shape = 'u32[]', space=smem, size = 0x4, offset = 0x4, fixed_abs, tag = 'smem constant byte address 0x4 - core index']
  #allocation1 [shape = 'u32[72,128]{1,0:T(1,128)}', space=vmem, size = 0x9000, scoped, tag = 'internal scratch']
  #allocation2 [shape = 'f32[1]{0:T(128)S(6)}', space=smem, size = 0x200, scoped, tag = 'scoped memory for unet_attention_block.1']
  %s0 = inlined_call_operand.vmem [shape: f32[2,4,256], index: 0, kind: input, shape index: {}]
  %s1 = inlined_call_operand.vmem [shape: f32[2,4,256], index: 1, kind: input, shape index: {}]
  %s2 = inlined_call_operand.vmem [shape: bf16[8,4], index: 2, kind: input, shape index: {}]
  %s3 = inlined_call_operand.vmem [shape: bf16[8,4], index: 3, kind: input, shape index: {}]
  %s4 = inlined_call_operand.vmem [shape: f32[8,1], index: 4, kind: input, shape index: {}]
  %s5 = inlined_call_operand.vmem [shape: f32[8,1], index: 5, kind: input, shape index: {}]
  %s6 = inlined_call_operand.<no memory space> [shape: f32[1], index: 6, kind: input, shape index: {}]
  %s7 = inlined_call_operand.vmem [shape: f32[2,4,256], index: 7, kind: output, shape index: {}]
  %s8 = sld [smem:[#allocation0]]
  $region61: #{unet_attention_block.1} parent=0
    _
  %s10 = ssub.s32 1, %s8
  %s11 = scalar_select 0, %s10, %s8
  %12 = sst [smem:[#allocation2]] %s6
  loop: start=0, step=1, limit=4
  $region2: #{unet_attention_block.1} parent=0 // loop_pre_header
    _
  $region3: #{unet_attention_block.1} parent=0 // loop_header
    %s14 = sphi 0, %s18
    %p15 = scmp.ge.s32.totalorder %s14, 4
    %s21 = sphi 0, %s33
    %s22 = sphi 0, %s29
    %s23 = sphi 0, %s21
    %s24 = sphi 0, %s22
    %s25 = sphi 0, %s23
    %s26 = sphi 0, %s24
    %s38 = sphi 0, %s40
    %s41 = sphi 0, %s38
    %s42 = sphi 0, %s41
    %s58 = sphi 0, %s42
    %s66 = sphi 0, %s68
    %s69 = sphi 0, %s66
    %s70 = sphi 0, %s69
    %s86 = sphi 0, %s70
    %s90 = sphi 0, %s90
    %s92 = sphi 0, %s90
    %s93 = sphi 0, %s92
    %s107 = sphi 0, %s93
    %s111 = sphi 0, %s111
    %s113 = sphi 0, %s111
    %s114 = sphi 0, %s113
    %s128 = sphi 0, %s114
    %s132 = sphi 0, %s132
    %s134 = sphi 0, %s132
    %s135 = sphi 0, %s134
    %s149 = sphi 0, %s135
    %s153 = sphi 0, %s153
    %s155 = sphi 0, %s153
    %s156 = sphi 0, %s155
    %s170 = sphi 0, %s156
    %s174 = sphi 0, %s174
    %s176 = sphi 0, %s174
    %s177 = sphi 0, %s176
    %s191 = sphi 0, %s177
    %s199 = sphi 0, %s201
    %s202 = sphi 0, %s199
    %s203 = sphi 0, %s202
    %s219 = sphi 0, %s203
  $region4: #{unet_attention_block.1} parent=0 // loop_header_branch
    %17 = sbr.rel (%p15) target = $region8
  $region5: #{unet_attention_block.1} parent=0 // loop_body
    %s19 = ssub.s32 %s14, 1
    %s20 = ssub.s32 %s14, 2
    %s27 = sadd.s32 1, %s22
    %p28 = scmp.ge.s32.totalorder %s27, 1
    %s29 = scalar_select %p28, 0, %s27
    %s30 = sadd.s32 1, %s21
    %s31 = scalar_select %p28, %s30, %s21
    %p32 = scmp.ge.s32.totalorder %s31, 2
    %s33 = scalar_select %p32, 0, %s31
    %s34 = ssub.s32 %s21, %s33
    %s35 = ssub.s32 %s22, %s29
    %s36 = sor.u32 %s34, %s35
    %p37 = scmp.eq.s32.totalorder %s36, 0
    %s39 = sadd.s32 %s38, 1
    %s40 = scalar_select %p37, %s38, %s39
    %p43 = pneg %p37
    %p44 = scmp.eq.s32.totalorder %s14, 1
    %p45 = por %p43, %p44
    %p46 = scmp.ne.s32.totalorder %s38, %s41
    %p47 = scmp.eq.s32.totalorder %s14, 0
    %p48 = por %p46, %p47
    %p49 = scmp.ne.s32.totalorder %s38, %s41
    %p50 = scmp.eq.s32.totalorder %s19, 1
    %p51 = por %p49, %p50
    %p52 = scmp.ne.s32.totalorder %s41, %s42
    %p53 = scmp.eq.s32.totalorder %s19, 0
    %p54 = por %p52, %p53
    %p55 = scmp.ne.s32.totalorder %s41, %s42
    %p56 = scmp.eq.s32.totalorder %s20, 1
    %p57 = por %p55, %p56
    %p59 = scmp.ne.s32.totalorder %s42, %s58
    %p60 = scmp.eq.s32.totalorder %s20, 0
    %p61 = por %p59, %p60
    %s62 = ssub.s32 %s21, %s33
    %s63 = ssub.s32 %s22, %s29
    %s64 = sor.u32 %s62, %s63
    %p65 = scmp.eq.s32.totalorder %s64, 0
    %s67 = sadd.s32 %s66, 1
    %s68 = scalar_select %p65, %s66, %s67
    %p71 = pneg %p65
    %p72 = scmp.eq.s32.totalorder %s14, 1
    %p73 = por %p71, %p72
    %p74 = scmp.ne.s32.totalorder %s66, %s69
    %p75 = scmp.eq.s32.totalorder %s14, 0
    %p76 = por %p74, %p75
    %p77 = scmp.ne.s32.totalorder %s66, %s69
    %p78 = scmp.eq.s32.totalorder %s19, 1
    %p79 = por %p77, %p78
    %p80 = scmp.ne.s32.totalorder %s69, %s70
    %p81 = scmp.eq.s32.totalorder %s19, 0
    %p82 = por %p80, %p81
    %p83 = scmp.ne.s32.totalorder %s69, %s70
    %p84 = scmp.eq.s32.totalorder %s20, 1
    %p85 = por %p83, %p84
    %p87 = scmp.ne.s32.totalorder %s70, %s86
    %p88 = scmp.eq.s32.totalorder %s20, 0
    %p89 = por %p87, %p88
    %s91 = sadd.s32 %s90, 1
    %p94 = scmp.eq.s32.totalorder %s14, 1
    %p95 = scmp.ne.s32.totalorder %s90, %s92
    %p96 = scmp.eq.s32.totalorder %s14, 0
    %p97 = por %p95, %p96
    %p98 = scmp.ne.s32.totalorder %s90, %s92
    %p99 = scmp.eq.s32.totalorder %s19, 1
    %p100 = por %p98, %p99
    %p101 = scmp.ne.s32.totalorder %s92, %s93
    %p102 = scmp.eq.s32.totalorder %s19, 0
    %p103 = por %p101, %p102
    %p104 = scmp.ne.s32.totalorder %s92, %s93
    %p105 = scmp.eq.s32.totalorder %s20, 1
    %p106 = por %p104, %p105
    %p108 = scmp.ne.s32.totalorder %s93, %s107
    %p109 = scmp.eq.s32.totalorder %s20, 0
    %p110 = por %p108, %p109
    %s112 = sadd.s32 %s111, 1
    %p115 = scmp.eq.s32.totalorder %s14, 1
    %p116 = scmp.ne.s32.totalorder %s111, %s113
    %p117 = scmp.eq.s32.totalorder %s14, 0
    %p118 = por %p116, %p117
    %p119 = scmp.ne.s32.totalorder %s111, %s113
    %p120 = scmp.eq.s32.totalorder %s19, 1
    %p121 = por %p119, %p120
    %p122 = scmp.ne.s32.totalorder %s113, %s114
    %p123 = scmp.eq.s32.totalorder %s19, 0
    %p124 = por %p122, %p123
    %p125 = scmp.ne.s32.totalorder %s113, %s114
    %p126 = scmp.eq.s32.totalorder %s20, 1
    %p127 = por %p125, %p126
    %p129 = scmp.ne.s32.totalorder %s114, %s128
    %p130 = scmp.eq.s32.totalorder %s20, 0
    %p131 = por %p129, %p130
    %s133 = sadd.s32 %s132, 1
    %p136 = scmp.eq.s32.totalorder %s14, 1
    %p137 = scmp.ne.s32.totalorder %s132, %s134
    %p138 = scmp.eq.s32.totalorder %s14, 0
    %p139 = por %p137, %p138
    %p140 = scmp.ne.s32.totalorder %s132, %s134
    %p141 = scmp.eq.s32.totalorder %s19, 1
    %p142 = por %p140, %p141
    %p143 = scmp.ne.s32.totalorder %s134, %s135
    %p144 = scmp.eq.s32.totalorder %s19, 0
    %p145 = por %p143, %p144
    %p146 = scmp.ne.s32.totalorder %s134, %s135
    %p147 = scmp.eq.s32.totalorder %s20, 1
    %p148 = por %p146, %p147
    %p150 = scmp.ne.s32.totalorder %s135, %s149
    %p151 = scmp.eq.s32.totalorder %s20, 0
    %p152 = por %p150, %p151
    %s154 = sadd.s32 %s153, 1
    %p157 = scmp.eq.s32.totalorder %s14, 1
    %p158 = scmp.ne.s32.totalorder %s153, %s155
    %p159 = scmp.eq.s32.totalorder %s14, 0
    %p160 = por %p158, %p159
    %p161 = scmp.ne.s32.totalorder %s153, %s155
    %p162 = scmp.eq.s32.totalorder %s19, 1
    %p163 = por %p161, %p162
    %p164 = scmp.ne.s32.totalorder %s155, %s156
    %p165 = scmp.eq.s32.totalorder %s19, 0
    %p166 = por %p164, %p165
    %p167 = scmp.ne.s32.totalorder %s155, %s156
    %p168 = scmp.eq.s32.totalorder %s20, 1
    %p169 = por %p167, %p168
    %p171 = scmp.ne.s32.totalorder %s156, %s170
    %p172 = scmp.eq.s32.totalorder %s20, 0
    %p173 = por %p171, %p172
    %s175 = sadd.s32 %s174, 1
    %p178 = scmp.eq.s32.totalorder %s14, 1
    %p179 = scmp.ne.s32.totalorder %s174, %s176
    %p180 = scmp.eq.s32.totalorder %s14, 0
    %p181 = por %p179, %p180
    %p182 = scmp.ne.s32.totalorder %s174, %s176
    %p183 = scmp.eq.s32.totalorder %s19, 1
    %p184 = por %p182, %p183
    %p185 = scmp.ne.s32.totalorder %s176, %s177
    %p186 = scmp.eq.s32.totalorder %s19, 0
    %p187 = por %p185, %p186
    %p188 = scmp.ne.s32.totalorder %s176, %s177
    %p189 = scmp.eq.s32.totalorder %s20, 1
    %p190 = por %p188, %p189
    %p192 = scmp.ne.s32.totalorder %s177, %s191
    %p193 = scmp.eq.s32.totalorder %s20, 0
    %p194 = por %p192, %p193
    %s195 = ssub.s32 %s21, %s33
    %s196 = ssub.s32 %s22, %s29
    %s197 = sor.u32 %s195, %s196
    %p198 = scmp.eq.s32.totalorder %s197, 0
    %s200 = sadd.s32 %s199, 1
    %s201 = scalar_select %p198, %s199, %s200
    %p204 = pneg %p198
    %p205 = scmp.eq.s32.totalorder %s14, 1
    %p206 = por %p204, %p205
    %p207 = scmp.ne.s32.totalorder %s199, %s202
    %p208 = scmp.eq.s32.totalorder %s14, 0
    %p209 = por %p207, %p208
    %p210 = scmp.ne.s32.totalorder %s199, %s202
    %p211 = scmp.eq.s32.totalorder %s19, 1
    %p212 = por %p210, %p211
    %p213 = scmp.ne.s32.totalorder %s202, %s203
    %p214 = scmp.eq.s32.totalorder %s19, 0
    %p215 = por %p213, %p214
    %p216 = scmp.ne.s32.totalorder %s202, %s203
    %p217 = scmp.eq.s32.totalorder %s20, 1
    %p218 = por %p216, %p217
    %p220 = scmp.ne.s32.totalorder %s203, %s219
    %p221 = scmp.eq.s32.totalorder %s20, 0
    %p222 = por %p220, %p221
    %p223 = scmp.le.s32.totalorder 1, %s14
    %p224 = scmp.lt.s32.totalorder %s14, 3
    %p225 = pnand %p223, %p224
    %p226 = pneg %p225
    // Predicated region
    $region9: #{unet_attention_block.1} parent=5 // pred_check
      _
    $region10: #{unet_attention_block.1} parent=5 // pred_check_branch
      %228 = sbr.rel (%p225) target = $region12
    $region11: #{unet_attention_block.1} parent=5 // pred_region
      %s229 = ssub.s32 %s14, 1
      // Predicated region
      $region13: #{unet_attention_block.1} parent=11 // pred_check
        %p230 = pneg %p103
      $region14: #{unet_attention_block.1} parent=11 // pred_check_branch
        %232 = sbr.rel (%p230) target = $region16
      $region15: #{unet_attention_block.1} parent=11 // pred_region
        _
      $region16: #{unet_attention_block.1} parent=11 // pred_fallthru
        _
      // Predicated region
      $region17: #{unet_attention_block.1} parent=11 // pred_check
        %p233 = pneg %p124
      $region18: #{unet_attention_block.1} parent=11 // pred_check_branch
        %235 = sbr.rel (%p233) target = $region20
      $region19: #{unet_attention_block.1} parent=11 // pred_region
        _
      $region20: #{unet_attention_block.1} parent=11 // pred_fallthru
        _
      // Predicated region
      $region21: #{unet_attention_block.1} parent=11 // pred_check
        %p236 = pneg %p145
      $region22: #{unet_attention_block.1} parent=11 // pred_check_branch
        %238 = sbr.rel (%p236) target = $region24
      $region23: #{unet_attention_block.1} parent=11 // pred_region
        _
      $region24: #{unet_attention_block.1} parent=11 // pred_fallthru
        _
      // Predicated region
      $region25: #{unet_attention_block.1} parent=11 // pred_check
        %p239 = pneg %p166
      $region26: #{unet_attention_block.1} parent=11 // pred_check_branch
        %241 = sbr.rel (%p239) target = $region28
      $region27: #{unet_attention_block.1} parent=11 // pred_region
        _
      $region28: #{unet_attention_block.1} parent=11 // pred_fallthru
        _
      // Predicated region
      $region29: #{unet_attention_block.1} parent=11 // pred_check
        %p242 = pneg %p187
      $region30: #{unet_attention_block.1} parent=11 // pred_check_branch
        %244 = sbr.rel (%p242) target = $region32
      $region31: #{unet_attention_block.1} parent=11 // pred_region
        _
      $region32: #{unet_attention_block.1} parent=11 // pred_fallthru
        _
    $region12: #{unet_attention_block.1} parent=5 // pred_fallthru
      _
    %p245 = scmp.lt.s32.totalorder %s14, 2
    // Predicated region
    $region33: #{unet_attention_block.1} parent=5 // pred_check
      %p246 = pneg %p245
    $region34: #{unet_attention_block.1} parent=5 // pred_check_branch
      %248 = sbr.rel (%p246) target = $region36
    $region35: #{unet_attention_block.1} parent=5 // pred_region
      // Predicated region
      $region37: #{unet_attention_block.1} parent=35 // pred_check
        %p249 = pneg %p48
      $region38: #{unet_attention_block.1} parent=35 // pred_check_branch
        %251 = sbr.rel (%p249) target = $region40
      $region39: #{unet_attention_block.1} parent=35 // pred_region
        %s252 = smul.u32 2, %s22
        %p253 = scmp.lt.s32.totalorder %s21, 1
        %s254 = scalar_select %p253, %s21, 1
        %p255 = scmp.lt.s32.totalorder %s252, 1
        %s256 = scalar_select %p255, %s252, 1
        %s257 = smul.addr %s254, 2
        %s258 = sadd.s32 %s256, %s257
        %s259 = smul.addr %s258, 4
        %s260 = scalar_lea.vmem %s0, %s259
        %s261 = smul.u32 2, %s22
      $region40: #{unet_attention_block.1} parent=35 // pred_fallthru
        _
      // Predicated region
      $region41: #{unet_attention_block.1} parent=35 // pred_check
        %p262 = pneg %p76
      $region42: #{unet_attention_block.1} parent=35 // pred_check_branch
        %264 = sbr.rel (%p262) target = $region44
      $region43: #{unet_attention_block.1} parent=35 // pred_region
        %s265 = smul.u32 2, %s22
        %p266 = scmp.lt.s32.totalorder %s21, 1
        %s267 = scalar_select %p266, %s21, 1
        %p268 = scmp.lt.s32.totalorder %s265, 1
        %s269 = scalar_select %p268, %s265, 1
        %s270 = smul.addr %s267, 2
        %s271 = sadd.s32 %s269, %s270
        %s272 = smul.addr %s271, 4
        %s273 = scalar_lea.vmem %s1, %s272
        %s274 = smul.u32 2, %s22
      $region44: #{unet_attention_block.1} parent=35 // pred_fallthru
        _
    $region36: #{unet_attention_block.1} parent=5 // pred_fallthru
      _
    %p275 = scmp.le.s32.totalorder 1, %s14
    %p276 = scmp.lt.s32.totalorder %s14, 3
    %p277 = pnand %p275, %p276
    %p278 = pneg %p277
    // Predicated region
    $region45: #{unet_attention_block.1} parent=5 // pred_check
      _
    $region46: #{unet_attention_block.1} parent=5 // pred_check_branch
      %280 = sbr.rel (%p277) target = $region48
    $region47: #{unet_attention_block.1} parent=5 // pred_region
      %s281 = ssub.s32 %s14, 1
      %s282 = smul.u32 2, %s24
      %p283 = scmp.lt.s32.totalorder %s23, 1
      %s284 = scalar_select %p283, %s23, 1
      %p285 = scmp.lt.s32.totalorder %s282, 1
      %s286 = scalar_select %p285, %s282, 1
      %s287 = smul.addr %s284, 2
      %s288 = sadd.s32 %s286, %s287
      %s289 = smul.addr %s288, 4
      %s290 = scalar_lea.vmem %s0, %s289
      %p291 = pneg %p54
      %p292 = pneg %p51
      %s293 = smul.u32 2, %s24
      %p294 = scmp.lt.s32.totalorder %s23, 1
      %s295 = scalar_select %p294, %s23, 1
      %p296 = scmp.lt.s32.totalorder %s293, 1
      %s297 = scalar_select %p296, %s293, 1
      %s298 = smul.addr %s295, 2
      %s299 = sadd.s32 %s297, %s298
      %s300 = smul.addr %s299, 4
      %s301 = scalar_lea.vmem %s1, %s300
      %p302 = pneg %p82
      %p303 = pneg %p79
      %p304 = pneg %p103
      %p305 = pneg %p100
      %p306 = pneg %p124
      %p307 = pneg %p121
      %p308 = pneg %p145
      %p309 = pneg %p142
      %p310 = pneg %p166
      %p311 = pneg %p163
      %p312 = pneg %p187
      %p313 = pneg %p184
      %p314 = pneg %p215
      %p315 = pneg %p212
      %s316 = smul.u32 2, %s24
      %p317 = scmp.lt.s32.totalorder %s23, 1
      %s318 = scalar_select %p317, %s23, 1
      %p319 = scmp.lt.s32.totalorder %s316, 1
      %s320 = scalar_select %p319, %s316, 1
      %s321 = smul.addr %s318, 2
      %s322 = sadd.s32 %s320, %s321
      %s323 = smul.addr %s322, 4
      %s324 = scalar_lea.vmem %s7, %s323
      %s325 = smul.u32 2, %s24
      %p326 = scmp.lt.s32.totalorder %s23, 1
      %s327 = scalar_select %p326, %s23, 1
      %p328 = scmp.lt.s32.totalorder %s325, 1
      %s329 = scalar_select %p328, %s325, 1
      %s330 = smul.addr %s327, 2
      %s331 = sadd.s32 %s329, %s330
      %s332 = smul.addr %s331, 4
      %s333 = scalar_lea.vmem %s0, %s332
      %s334 = smul.u32 2, %s24
      %s335 = smul.u32 2, %s24
      %p336 = scmp.lt.s32.totalorder %s23, 1
      %s337 = scalar_select %p336, %s23, 1
      %p338 = scmp.lt.s32.totalorder %s335, 1
      %s339 = scalar_select %p338, %s335, 1
      %s340 = smul.addr %s337, 2
      %s341 = sadd.s32 %s339, %s340
      %s342 = smul.addr %s341, 4
      %s343 = scalar_lea.vmem %s1, %s342
      %s344 = smul.u32 2, %s24
      %s345 = smul.u32 2, %s24
      %p346 = scmp.lt.s32.totalorder %s23, 1
      %s347 = scalar_select %p346, %s23, 1
      %p348 = scmp.lt.s32.totalorder %s345, 1
      %s349 = scalar_select %p348, %s345, 1
      %s350 = smul.addr %s347, 2
      %s351 = sadd.s32 %s349, %s350
      %s352 = smul.addr %s351, 4
      %s353 = scalar_lea.vmem %s7, %s352
      %s354 = smul.u32 2, %s24
      %v356 = vld [vmem:[%s343] sm:$0xff]
      %v357 = vld [vmem:[%s333] sm:$0xff]
      %359 = vst [vmem:[#allocation1] ss:$2 sm:$0xff] %v357
      %v360 = vld.sshfl [vmem:[#allocation1] sm:$0xff pattern:$0x75316420]
      %v361 = vld.sshfl [vmem:[#allocation1 + $0x8] sm:$0xff pattern:$0x75316420]
      %v364 = vpack.c.bf16 %v360, %v360
      %v365 = vpack.c.bf16 %v361, %v361
      %367 = vst [vmem:[#allocation1] ss:$2 sm:$0xff] %v356
      %v368 = vld.sshfl [vmem:[#allocation1] sm:$0xff pattern:$0x75316420]
      %v369 = vld.sshfl [vmem:[#allocation1 + $0x8] sm:$0xff pattern:$0x75316420]
      %v372 = vpack.c.bf16 %v368, %v368
      %v373 = vpack.c.bf16 %v369, %v369
      %v374 = vld [vmem:[%s2] sm:$0xf]
      %v375 = vld [vmem:[%s3] sm:$0xf]
      %vm376 = vcmask 31744
      %v378 = vsel %vm376, %v375, 0
      %vm380 = vcmask 1041408
      %v382 = vsel %vm380, %v372, 0
      %v385 = vsel %vm380, %v373, 0
      %387 = vmatpush.bf16.msra.mxu0 0
      %388 = vmatpush.bf16.msra.mxu0 0
      %389 = vmatpush.bf16.msra.mxu0 0
      %390 = vmatpush.bf16.msra.mxu0 0
      %391 = vmatpush.bf16.msra.mxu0 0
      %392 = vmatpush.bf16.msra.mxu0 0
      %393 = vmatpush.bf16.msra.mxu0 0
      %394 = vmatpush.bf16.msra.mxu0 %v382
      %395 = vmatmul.bf16.gmra.mxu0 %v378
      %v396 = vpop.f32.mrf.mxu0
      %v397 = vadd.f32 0.0, %v396
      %v398 = vpop.f32.mrf.mxu0
      %399 = vdwg.mxu0
      %400 = vmatpush.bf16.msra.mxu0 0
      %401 = vmatpush.bf16.msra.mxu0 0
      %402 = vmatpush.bf16.msra.mxu0 0
      %403 = vmatpush.bf16.msra.mxu0 0
      %404 = vmatpush.bf16.msra.mxu0 0
      %405 = vmatpush.bf16.msra.mxu0 0
      %406 = vmatpush.bf16.msra.mxu0 0
      %407 = vmatpush.bf16.msra.mxu0 %v385
      %408 = vmatmul.bf16.gmra.mxu0 %v378
      %v409 = vpop.f32.mrf.mxu0
      %v410 = vadd.f32 0.0, %v409
      %v411 = vpop.f32.mrf.mxu0
      %412 = vdwg.mxu0
      %v414 = vsel %vm376, %v374, 0
      %v417 = vsel %vm380, %v364, 0
      %v420 = vsel %vm380, %v365, 0
      %422 = vmatpush.bf16.msra.mxu0 0
      %423 = vmatpush.bf16.msra.mxu0 0
      %424 = vmatpush.bf16.msra.mxu0 0
      %425 = vmatpush.bf16.msra.mxu0 0
      %426 = vmatpush.bf16.msra.mxu0 0
      %427 = vmatpush.bf16.msra.mxu0 0
      %428 = vmatpush.bf16.msra.mxu0 0
      %429 = vmatpush.bf16.msra.mxu0 %v417
      %430 = vmatmul.bf16.gmra.mxu0 %v414
      %v431 = vpop.f32.mrf.mxu0
      %v432 = vadd.f32 %v397, %v431
      %v433 = vpop.f32.mrf.mxu0
      %434 = vdwg.mxu0
      %435 = vmatpush.bf16.msra.mxu0 0
      %436 = vmatpush.bf16.msra.mxu0 0
      %437 = vmatpush.bf16.msra.mxu0 0
      %438 = vmatpush.bf16.msra.mxu0 0
      %439 = vmatpush.bf16.msra.mxu0 0
      %440 = vmatpush.bf16.msra.mxu0 0
      %441 = vmatpush.bf16.msra.mxu0 0
      %442 = vmatpush.bf16.msra.mxu0 %v420
      %443 = vmatmul.bf16.gmra.mxu0 %v414
      %v444 = vpop.f32.mrf.mxu0
      %v445 = vadd.f32 %v410, %v444
      %v446 = vpop.f32.mrf.mxu0
      %447 = vdwg.mxu0
      %v448 = vld [vmem:[%s4] sm:$0xff]
      %450 = vset.pattern.permute.xlu0 0
      %451 = vperm.xlu0 %450, %v448
      %v452 = vpop.permute.xlu0 %451
      %v454 = vadd.f32 %v432, %v452
      %v455 = vadd.f32 %v445, %v452
      %v456 = vmax.f32 %v454, 0.0
      %v457 = vmax.f32 %v455, 0.0
      %v458 = vld [vmem:[%s5] sm:$0xff]
      %460 = vset.pattern.permute.xlu0 0
      %461 = vperm.xlu0 %460, %v458
      %v462 = vpop.permute.xlu0 %461
      %v464 = vmul.f32 %v456, %v462
      %v465 = vmul.f32 %v457, %v462
      %v466 = vrot.slane %v464, 4
      %v467 = vadd.f32 %v464, %v466
      %v468 = vrot.slane %v467, 2
      %v469 = vadd.f32 %v467, %v468
      %v470 = vrot.slane %v469, 1
      %v471 = vadd.f32 %v469, %v470
      %v472 = vrot.slane %v465, 4
      %v473 = vadd.f32 %v465, %v472
      %v474 = vrot.slane %v473, 2
      %v475 = vadd.f32 %v473, %v474
      %v476 = vrot.slane %v475, 1
      %v477 = vadd.f32 %v475, %v476
      %s478 = sld [smem:[#allocation2]]
      %v479 = vstv %s478
      %v480 = vadd.f32 %v471, %v479
      %v481 = vadd.f32 %v477, %v479
      %v482 = vxor.u32 %v480, 2147483648
      %v483 = vxor.u32 %v481, 2147483648
      %v484 = vmul.f32 %v482, 1.442695
      %v485 = vpow.pop %v484
      %v486 = vmul.f32 %v483, 1.442695
      %v487 = vpow.pop %v486
      %v488 = vadd.f32 %v485, 1.0
      %v489 = vadd.f32 %v487, 1.0
      %v490 = vrcp.pop %v488
      %v491 = vmul.f32 %v488, %v490
      %v492 = vsub.f32 1.0, %v491
      %v493 = vmul.f32 %v490, %v492
      %v494 = vadd.f32 %v490, %v493
      %vm495 = vweird.f32 %v488
      %vm496 = vweird.f32 %v490
      %vm497 = vmor %vm495, %vm496
      %v498 = vsel %vm497, %v490, %v494
      %v499 = vand.u32 2147483647, %v488
      %vm500 = vcmp.eq.f32.partialorder %v499, 8.507059e+37
      %v501 = vand.u32 %v488, 2147483648
      %v502 = vor.u32 1.1754944e-38, %v501
      %v503 = vsel %vm500, %v502, %v498
      %v504 = vmul.f32 1.0, %v503
      %v505 = vrcp.pop %v489
      %v506 = vmul.f32 %v489, %v505
      %v507 = vsub.f32 1.0, %v506
      %v508 = vmul.f32 %v505, %v507
      %v509 = vadd.f32 %v505, %v508
      %vm510 = vweird.f32 %v489
      %vm511 = vweird.f32 %v505
      %vm512 = vmor %vm510, %vm511
      %v513 = vsel %vm512, %v505, %v509
      %v514 = vand.u32 2147483647, %v489
      %vm515 = vcmp.eq.f32.partialorder %v514, 8.507059e+37
      %v516 = vand.u32 %v489, 2147483648
      %v517 = vor.u32 1.1754944e-38, %v516
      %v518 = vsel %vm515, %v517, %v513
      %v519 = vmul.f32 1.0, %v518
      %v522 = vrot.slane %v519, 4
      %vm523 = vcmask 1043456
      %v524 = vsel %vm523, %v504, %v522
      %v526 = vmul.f32 %v356, %v524
      %527 = vst [vmem:[%s353] sm:$0xff] %v526
      %s528 = smul.u32 2, %s24
      %p529 = scmp.lt.s32.totalorder %s23, 1
      %s530 = scalar_select %p529, %s23, 1
      %p531 = scmp.lt.s32.totalorder %s528, 1
      %s532 = scalar_select %p531, %s528, 1
      %s533 = smul.addr %s530, 2
      %s534 = sadd.s32 %s532, %s533
      %s535 = smul.addr %s534, 4
      %s536 = scalar_lea.vmem %s7, %s535
      // Predicated region
      $region49: #{unet_attention_block.1} parent=47 // pred_check
        %p537 = pneg %p212
      $region50: #{unet_attention_block.1} parent=47 // pred_check_branch
        %539 = sbr.rel (%p537) target = $region52
      $region51: #{unet_attention_block.1} parent=47 // pred_region
        %s540 = smul.u32 2, %s24
      $region52: #{unet_attention_block.1} parent=47 // pred_fallthru
        _
    $region48: #{unet_attention_block.1} parent=5 // pred_fallthru
      _
    %p541 = scmp.le.s32.totalorder 2, %s14
    // Predicated region
    $region53: #{unet_attention_block.1} parent=5 // pred_check
      %p542 = pneg %p541
    $region54: #{unet_attention_block.1} parent=5 // pred_check_branch
      %544 = sbr.rel (%p542) target = $region56
    $region55: #{unet_attention_block.1} parent=5 // pred_region
      %s545 = ssub.s32 %s14, 2
      // Predicated region
      $region57: #{unet_attention_block.1} parent=55 // pred_check
        %p546 = pneg %p218
      $region58: #{unet_attention_block.1} parent=55 // pred_check_branch
        %548 = sbr.rel (%p546) target = $region60
      $region59: #{unet_attention_block.1} parent=55 // pred_region
        %s549 = smul.u32 2, %s26
        %p550 = scmp.lt.s32.totalorder %s25, 1
        %s551 = scalar_select %p550, %s25, 1
        %p552 = scmp.lt.s32.totalorder %s549, 1
        %s553 = scalar_select %p552, %s549, 1
        %s554 = smul.addr %s551, 2
        %s555 = sadd.s32 %s553, %s554
        %s556 = smul.addr %s555, 4
        %s557 = scalar_lea.vmem %s7, %s556
      $region60: #{unet_attention_block.1} parent=55 // pred_fallthru
        _
    $region56: #{unet_attention_block.1} parent=5 // pred_fallthru
      _
  $region6: #{unet_attention_block.1} parent=0 // loop_footer
    %s18 = sadd.s32 1, %s14
  $region7: #{unet_attention_block.1} parent=0 // loop_footer_branch
    %13 = sbr.rel target = $region3
  $region8: #{unet_attention_block.1} parent=0 // loop_exit
    _

</llo_original>
